<compile_context>
chip_gen: v5e
topology: v5e:2x2
jax: 0.10.0
libtpu: 0.0.40
codegen_flags: <defaults>
</compile_context>

<pallas_src>
import jax
import jax.numpy as jnp
from jax.experimental import pallas as pl
from jax.experimental.pallas import tpu as pltpu


# ----------------------------- model hyper-params -----------------------------
BOND_DIM = 2          # bond_dim
EMB_DIM = 2           # embedding_dim  (poly degree = EMB_DIM - 1)
MPS_OUT = 8           # MPSLayer out_dim
HIDDEN = 24           # first dense layer width
OUT_DIM = 1           # output_dim

BATCH = 8             # small example batch
INPUT_SIZE = 8        # number of tabular features (X.shape[1] stand-in)

N_NODES = INPUT_SIZE + 1                 # MPSLayer n_features (includes out node)
OUT_POS = N_NODES // 2                   # tensorkrowch default out_position
N_MID = N_NODES - 3                      # middle input nodes (excl. 2 boundaries + out)

LANES = 128


def _site_maps():
    """Map each stacked middle-core index k -> (k, feature index), split by side."""
    left, right = [], []
    for k in range(N_MID):
        p = k + 1
        if p >= OUT_POS:
            p += 1                        # skip the output-node position
        feat = p if p < OUT_POS else p - 1
        (left if p < OUT_POS else right).append((k, feat))
    return left, right


LEFT_MIDS, RIGHT_MIDS = _site_maps()

# ----- flat-parameter layout (one f32 array, lives in SMEM inside the kernel) -----
OFF_TL = 0                                                   # t_left  (E, D)       -> d*D + a
OFF_MID = OFF_TL + EMB_DIM * BOND_DIM                        # t_mid   (K, D, E, D) -> ((k*D+a)*E+d)*D+c
OFF_TR = OFF_MID + N_MID * BOND_DIM * EMB_DIM * BOND_DIM     # t_right (D, E)       -> c*E + d
OFF_T = OFF_TR + BOND_DIM * EMB_DIM                          # fused head T (D, D)  -> a*D + c
OFF_B = OFF_T + BOND_DIM * BOND_DIM                          # fused scalar bias
N_PARAMS = OFF_B + 1


# --------------------------------- kernel -------------------------------------
def mps_dense_kernel(x_ref, p_ref, out_ref):
    """x_ref: (F, R, 128) VMEM; p_ref: (N_PARAMS,) SMEM; out_ref: (R, 128) VMEM."""
    D, E = BOND_DIM, EMB_DIM
    F, R, _lanes = x_ref.shape

    # Row-chunking: keep ~10-15 live (CHUNK,128) vregs per chunk regardless of
    # how big the DMA tile (R) is.  R is either <= 8 (full array) or a multiple
    # of 8 by construction in the wrapper.
    CHUNK = 8 if (R >= 8 and R % 8 == 0) else R
    n_chunks = R // CHUNK

    # Hoist all scalar parameter reads (SMEM -> sreg) out of the chunk loop;
    # scalars broadcast for free against (CHUNK, 128) slabs.
    c_tl = [[p_ref[OFF_TL + d * D + a] for d in range(E)] for a in range(D)]           # [a][d]
    c_mid = [[[[p_ref[OFF_MID + ((k * D + a) * E + d) * D + c] for d in range(E)]
               for c in range(D)] for a in range(D)] for k in range(N_MID)]             # [k][a][c][d]
    c_tr = [[p_ref[OFF_TR + c * E + d] for d in range(E)] for c in range(D)]            # [c][d]
    c_hd = [[p_ref[OFF_T + a * D + c] for c in range(D)] for a in range(D)]             # [a][c]
    c_b = p_ref[OFF_B]

    def poly(coefs, xf):
        # c0 + c1*x + c2*x^2 + ...  (EMB_DIM==2 -> exactly c0 + c1*x, no x^0 mul)
        acc = coefs[0] + coefs[1] * xf
        xp = xf
        for d in range(2, len(coefs)):
            xp = xp * xf
            acc = acc + coefs[d] * xp
        return acc                                            # (CHUNK, 128)

    def do_chunk(r0):
        def feat(f):
            return x_ref[f, r0:r0 + CHUNK, :]                 # static slice -> (CHUNK, 128)

        # ---- left boundary (feature 0), then middle cores left of the output node
        x0 = feat(0)
        Lv = [poly(c_tl[a], x0) for a in range(D)]
        for k, f in LEFT_MIDS:
            xf = feat(f)
            M = [[poly(c_mid[k][a][c], xf) for c in range(D)] for a in range(D)]
            Lv = [sum(Lv[a] * M[a][c] for a in range(D)) for c in range(D)]

        # ---- right boundary (feature F-1), then middle cores right of the output node
        xl = feat(F - 1)
        Rv = [poly(c_tr[c], xl) for c in range(D)]
        for k, f in reversed(RIGHT_MIDS):
            xf = feat(f)
            M = [[poly(c_mid[k][a][c], xf) for c in range(D)] for a in range(D)]
            Rv = [sum(M[a][c] * Rv[c] for c in range(D)) for a in range(D)]

        # ---- fused output core + Linear(8,24) + Linear(24,1):
        #      y = sum_{a,c} L[a] * T[a,c] * R[c] + b_eff
        y = c_b + sum(Lv[a] * sum(c_hd[a][c] * Rv[c] for c in range(D)) for a in range(D))
        out_ref[r0:r0 + CHUNK, :] = y                         # dense multi-sublane store

    for ci in range(n_chunks):                                # static, aligned chunk offsets
        do_chunk(ci * CHUNK)


# --------------------------------- wrapper -------------------------------------
def _pick_row_tile(rows):
    """Rows (of 128 lanes) per grid step: big enough to amortize the ~0.35 us
    step overhead (up to 256 rows ~ 1 MiB/tile), small enough to leave >=2
    'parallel' steps for v7x's two TensorCores, and always either the full row
    count or a multiple of 8.  Double-buffered tiles stay well under even
    v5e's 16 MiB default scoped VMEM."""
    if rows <= 8:
        return rows
    for cand in (256, 128, 64, 32, 16, 8):
        if rows >= 2 * cand:
            return cand
    return 8


@jax.jit
def mps_with_dense(x, t_left, t_mid, t_right, t_out, w1, b1, w2, b2):
    B, F = x.shape
    # Head fusion below requires a single output column and NO activation
    # between the two Linear layers (true for this module).
    assert OUT_DIM == 1 and w2.shape[-1] == OUT_DIM and b2.shape[-1] == OUT_DIM

    # Fuse output core + Linear(8,24) + Linear(24,1) at trace time:
    #   T[a, c] = sum_{o, h} t_out[a, o, c] * w1[o, h] * w2[h, 0]
    #   b_eff   = b1 @ w2 + b2
    w_eff = (w1 @ w2)[:, 0]                                   # (O,)
    T = jnp.einsum('aoc,o->ac', t_out, w_eff)                 # (D, D)
    b_eff = (b1 @ w2 + b2).reshape(-1)                        # (1,)

    params = jnp.concatenate([
        t_left.reshape(-1),            # (E, D)        indexed [d, a]
        t_mid.reshape(-1),             # (K, D, E, D)  indexed [k, a, d, c]
        t_right.reshape(-1),           # (D, E)        indexed [c, d]
        T.reshape(-1),                 # (D, D)        indexed [a, c]
        b_eff,
    ]).astype(jnp.float32)
    assert params.shape[0] == N_PARAMS

    # Batch on (sublanes, lanes): x -> (F, rows, 128), padded at the tail only.
    rows = pl.cdiv(B, LANES)
    r_tile = _pick_row_tile(rows)
    rows_total = ((rows + r_tile - 1) // r_tile) * r_tile
    b_pad = rows_total * LANES
    # TODO(synk): for very large batches, store x feature-major upstream so this
    # pad+transpose copy (one extra HBM round trip on a memory-bound kernel) goes away.
    x_p = jnp.pad(x.astype(jnp.float32), ((0, b_pad - B), (0, 0)))
    x_t = x_p.T.reshape(F, rows_total, LANES)

    out = pl.pallas_call(
        mps_dense_kernel,
        out_shape=jax.ShapeDtypeStruct((rows_total, LANES), jnp.float32),
        grid=(rows_total // r_tile,),
        in_specs=[
            pl.BlockSpec((F, r_tile, LANES), lambda i: (0, i, 0)),      # x tile (VMEM)
            pl.BlockSpec(memory_space=pltpu.MemorySpace.SMEM),          # packed params
        ],
        out_specs=pl.BlockSpec((r_tile, LANES), lambda i: (i, 0)),
        compiler_params=pltpu.CompilerParams(dimension_semantics=("parallel",)),
    )(x_t, params)
    return out.reshape(-1)[:B].reshape(B, OUT_DIM)


# ----------------------------- pure-JAX reference ------------------------------
def reference_forward(x, t_left, t_mid, t_right, t_out, w1, b1, w2, b2):
    xe = jnp.stack([x ** d for d in range(EMB_DIM)], axis=-1)          # (B, F, E)
    L = jnp.einsum('bd,dc->bc', xe[:, 0], t_left)
    for k, feat in LEFT_MIDS:
        M = jnp.einsum('bd,adc->bac', xe[:, feat], t_mid[k])
        L = jnp.einsum('ba,bac->bc', L, M)
    R = jnp.einsum('bd,ad->ba', xe[:, -1], t_right)
    for k, feat in reversed(RIGHT_MIDS):
        M = jnp.einsum('bd,adc->bac', xe[:, feat], t_mid[k])
        R = jnp.einsum('bac,bc->ba', M, R)
    core = jnp.einsum('ba,aoc,bc->bo', L, t_out, R)
    h = core @ w1 + b1
    return h @ w2 + b2


# ----------------------------------- main --------------------------------------
if __name__ == "__main__":
    key = jax.random.PRNGKey(0)
    ks = jax.random.split(key, 10)
    D, E, O, H = BOND_DIM, EMB_DIM, MPS_OUT, HIDDEN

    # 'randn_eye'-style deterministic init (identity channel at phys index 0 +
    # gaussian noise). Module uses std=1e-9; use 0.1 here so outputs are nontrivial.
    std = 0.1
    t_left = jax.random.normal(ks[0], (E, D), jnp.float32) * std
    t_left = t_left.at[0, 0].add(1.0)
    t_mid = jax.random.normal(ks[1], (N_MID, D, E, D), jnp.float32) * std
    t_mid = t_mid.at[:, :, 0, :].add(jnp.eye(D, dtype=jnp.float32))
    t_right = jax.random.normal(ks[2], (D, E), jnp.float32) * std
    t_right = t_right.at[0, 0].add(1.0)
    t_out = jax.random.normal(ks[3], (D, O, D), jnp.float32) * std
    t_out = t_out + jnp.eye(D, dtype=jnp.float32)[:, None, :]

    # Dense layers (PyTorch nn.Linear shapes (24,8),(24,),(1,24),(1,)); stored (in, out).
    w1 = jax.random.uniform(ks[4], (O, H), jnp.float32, -1.0, 1.0) / jnp.sqrt(O)
    b1 = jax.random.uniform(ks[5], (1, H), jnp.float32, -1.0, 1.0) / jnp.sqrt(O)
    w2 = jax.random.uniform(ks[6], (H, OUT_DIM), jnp.float32, -1.0, 1.0) / jnp.sqrt(H)
    b2 = jax.random.uniform(ks[7], (1, OUT_DIM), jnp.float32, -1.0, 1.0) / jnp.sqrt(H)

    # Small example batch (single 1-row tile path).
    x_small = jax.random.uniform(ks[8], (BATCH, INPUT_SIZE), jnp.float32)
    out_small = jax.block_until_ready(
        mps_with_dense(x_small, t_left, t_mid, t_right, t_out, w1, b1, w2, b2))
    ref_small = reference_forward(x_small, t_left, t_mid, t_right, t_out, w1, b1, w2, b2)
    assert out_small.shape == (BATCH, OUT_DIM)
    assert jnp.allclose(out_small, ref_small, rtol=1e-4, atol=1e-4), (out_small, ref_small)

    # Larger batch: exercises the multi-tile "parallel" grid, 8-row chunk loop
    # inside a 16-row tile, and the ragged-tail padding path.
    B_BIG = 4100
    x_big = jax.random.uniform(ks[9], (B_BIG, INPUT_SIZE), jnp.float32)
    out_big = jax.block_until_ready(
        mps_with_dense(x_big, t_left, t_mid, t_right, t_out, w1, b1, w2, b2))
    ref_big = reference_forward(x_big, t_left, t_mid, t_right, t_out, w1, b1, w2, b2)
    assert out_big.shape == (B_BIG, OUT_DIM)
    assert jnp.allclose(out_big, ref_big, rtol=1e-4, atol=1e-4)

    print("KERNEL_OK")
</pallas_src>

<mosaic_0001>
module attributes {stable_mosaic.version = 11 : i64} {
  func.func @mps_dense_kernel(%arg0: i32, %arg1: memref<8x1x128xf32, #tpu.memory_space<vmem>>, %arg2: memref<61xf32, #tpu.memory_space<smem>>, %arg3: memref<1x128xf32, #tpu.memory_space<vmem>>) attributes {dimension_semantics = [#tpu.dimension_semantics<parallel>], iteration_bounds = array<i64: 1>, scalar_prefetch = 0 : i64, scratch_operands = 0 : i64, tpu.core_type = #tpu.core_type<tc>, window_params = [{transform_indices = @transform_0, window_bounds = array<i64: 8, 1, 128>}, {transform_indices = @transform_1, window_bounds = array<i64: 61>}, {transform_indices = @transform_2, window_bounds = array<i64: 1, 128>}]} {
    %c0 = arith.constant 0 : index
    %0 = memref.load %arg2[%c0] : memref<61xf32, #tpu.memory_space<smem>>
    %c2 = arith.constant 2 : index
    %1 = memref.load %arg2[%c2] : memref<61xf32, #tpu.memory_space<smem>>
    %c1 = arith.constant 1 : index
    %2 = memref.load %arg2[%c1] : memref<61xf32, #tpu.memory_space<smem>>
    %c3 = arith.constant 3 : index
    %3 = memref.load %arg2[%c3] : memref<61xf32, #tpu.memory_space<smem>>
    %c4 = arith.constant 4 : index
    %4 = memref.load %arg2[%c4] : memref<61xf32, #tpu.memory_space<smem>>
    %c6 = arith.constant 6 : index
    %5 = memref.load %arg2[%c6] : memref<61xf32, #tpu.memory_space<smem>>
    %c5 = arith.constant 5 : index
    %6 = memref.load %arg2[%c5] : memref<61xf32, #tpu.memory_space<smem>>
    %c7 = arith.constant 7 : index
    %7 = memref.load %arg2[%c7] : memref<61xf32, #tpu.memory_space<smem>>
    %c8 = arith.constant 8 : index
    %8 = memref.load %arg2[%c8] : memref<61xf32, #tpu.memory_space<smem>>
    %c10 = arith.constant 10 : index
    %9 = memref.load %arg2[%c10] : memref<61xf32, #tpu.memory_space<smem>>
    %c9 = arith.constant 9 : index
    %10 = memref.load %arg2[%c9] : memref<61xf32, #tpu.memory_space<smem>>
    %c11 = arith.constant 11 : index
    %11 = memref.load %arg2[%c11] : memref<61xf32, #tpu.memory_space<smem>>
    %c12 = arith.constant 12 : index
    %12 = memref.load %arg2[%c12] : memref<61xf32, #tpu.memory_space<smem>>
    %c14 = arith.constant 14 : index
    %13 = memref.load %arg2[%c14] : memref<61xf32, #tpu.memory_space<smem>>
    %c13 = arith.constant 13 : index
    %14 = memref.load %arg2[%c13] : memref<61xf32, #tpu.memory_space<smem>>
    %c15 = arith.constant 15 : index
    %15 = memref.load %arg2[%c15] : memref<61xf32, #tpu.memory_space<smem>>
    %c16 = arith.constant 16 : index
    %16 = memref.load %arg2[%c16] : memref<61xf32, #tpu.memory_space<smem>>
    %c18 = arith.constant 18 : index
    %17 = memref.load %arg2[%c18] : memref<61xf32, #tpu.memory_space<smem>>
    %c17 = arith.constant 17 : index
    %18 = memref.load %arg2[%c17] : memref<61xf32, #tpu.memory_space<smem>>
    %c19 = arith.constant 19 : index
    %19 = memref.load %arg2[%c19] : memref<61xf32, #tpu.memory_space<smem>>
    %c20 = arith.constant 20 : index
    %20 = memref.load %arg2[%c20] : memref<61xf32, #tpu.memory_space<smem>>
    %c22 = arith.constant 22 : index
    %21 = memref.load %arg2[%c22] : memref<61xf32, #tpu.memory_space<smem>>
    %c21 = arith.constant 21 : index
    %22 = memref.load %arg2[%c21] : memref<61xf32, #tpu.memory_space<smem>>
    %c23 = arith.constant 23 : index
    %23 = memref.load %arg2[%c23] : memref<61xf32, #tpu.memory_space<smem>>
    %c24 = arith.constant 24 : index
    %24 = memref.load %arg2[%c24] : memref<61xf32, #tpu.memory_space<smem>>
    %c26 = arith.constant 26 : index
    %25 = memref.load %arg2[%c26] : memref<61xf32, #tpu.memory_space<smem>>
    %c25 = arith.constant 25 : index
    %26 = memref.load %arg2[%c25] : memref<61xf32, #tpu.memory_space<smem>>
    %c27 = arith.constant 27 : index
    %27 = memref.load %arg2[%c27] : memref<61xf32, #tpu.memory_space<smem>>
    %c28 = arith.constant 28 : index
    %28 = memref.load %arg2[%c28] : memref<61xf32, #tpu.memory_space<smem>>
    %c30 = arith.constant 30 : index
    %29 = memref.load %arg2[%c30] : memref<61xf32, #tpu.memory_space<smem>>
    %c29 = arith.constant 29 : index
    %30 = memref.load %arg2[%c29] : memref<61xf32, #tpu.memory_space<smem>>
    %c31 = arith.constant 31 : index
    %31 = memref.load %arg2[%c31] : memref<61xf32, #tpu.memory_space<smem>>
    %c32 = arith.constant 32 : index
    %32 = memref.load %arg2[%c32] : memref<61xf32, #tpu.memory_space<smem>>
    %c34 = arith.constant 34 : index
    %33 = memref.load %arg2[%c34] : memref<61xf32, #tpu.memory_space<smem>>
    %c33 = arith.constant 33 : index
    %34 = memref.load %arg2[%c33] : memref<61xf32, #tpu.memory_space<smem>>
    %c35 = arith.constant 35 : index
    %35 = memref.load %arg2[%c35] : memref<61xf32, #tpu.memory_space<smem>>
    %c36 = arith.constant 36 : index
    %36 = memref.load %arg2[%c36] : memref<61xf32, #tpu.memory_space<smem>>
    %c38 = arith.constant 38 : index
    %37 = memref.load %arg2[%c38] : memref<61xf32, #tpu.memory_space<smem>>
    %c37 = arith.constant 37 : index
    %38 = memref.load %arg2[%c37] : memref<61xf32, #tpu.memory_space<smem>>
    %c39 = arith.constant 39 : index
    %39 = memref.load %arg2[%c39] : memref<61xf32, #tpu.memory_space<smem>>
    %c40 = arith.constant 40 : index
    %40 = memref.load %arg2[%c40] : memref<61xf32, #tpu.memory_space<smem>>
    %c42 = arith.constant 42 : index
    %41 = memref.load %arg2[%c42] : memref<61xf32, #tpu.memory_space<smem>>
    %c41 = arith.constant 41 : index
    %42 = memref.load %arg2[%c41] : memref<61xf32, #tpu.memory_space<smem>>
    %c43 = arith.constant 43 : index
    %43 = memref.load %arg2[%c43] : memref<61xf32, #tpu.memory_space<smem>>
    %c44 = arith.constant 44 : index
    %44 = memref.load %arg2[%c44] : memref<61xf32, #tpu.memory_space<smem>>
    %c46 = arith.constant 46 : index
    %45 = memref.load %arg2[%c46] : memref<61xf32, #tpu.memory_space<smem>>
    %c45 = arith.constant 45 : index
    %46 = memref.load %arg2[%c45] : memref<61xf32, #tpu.memory_space<smem>>
    %c47 = arith.constant 47 : index
    %47 = memref.load %arg2[%c47] : memref<61xf32, #tpu.memory_space<smem>>
    %c48 = arith.constant 48 : index
    %48 = memref.load %arg2[%c48] : memref<61xf32, #tpu.memory_space<smem>>
    %c50 = arith.constant 50 : index
    %49 = memref.load %arg2[%c50] : memref<61xf32, #tpu.memory_space<smem>>
    %c49 = arith.constant 49 : index
    %50 = memref.load %arg2[%c49] : memref<61xf32, #tpu.memory_space<smem>>
    %c51 = arith.constant 51 : index
    %51 = memref.load %arg2[%c51] : memref<61xf32, #tpu.memory_space<smem>>
    %c52 = arith.constant 52 : index
    %52 = memref.load %arg2[%c52] : memref<61xf32, #tpu.memory_space<smem>>
    %c53 = arith.constant 53 : index
    %53 = memref.load %arg2[%c53] : memref<61xf32, #tpu.memory_space<smem>>
    %c54 = arith.constant 54 : index
    %54 = memref.load %arg2[%c54] : memref<61xf32, #tpu.memory_space<smem>>
    %c55 = arith.constant 55 : index
    %55 = memref.load %arg2[%c55] : memref<61xf32, #tpu.memory_space<smem>>
    %c56 = arith.constant 56 : index
    %56 = memref.load %arg2[%c56] : memref<61xf32, #tpu.memory_space<smem>>
    %c57 = arith.constant 57 : index
    %57 = memref.load %arg2[%c57] : memref<61xf32, #tpu.memory_space<smem>>
    %c58 = arith.constant 58 : index
    %58 = memref.load %arg2[%c58] : memref<61xf32, #tpu.memory_space<smem>>
    %c59 = arith.constant 59 : index
    %59 = memref.load %arg2[%c59] : memref<61xf32, #tpu.memory_space<smem>>
    %c60 = arith.constant 60 : index
    %60 = memref.load %arg2[%c60] : memref<61xf32, #tpu.memory_space<smem>>
    %c0_0 = arith.constant 0 : index
    %c0_1 = arith.constant 0 : index
    %c0_2 = arith.constant 0 : index
    %61 = vector.load %arg1[%c0_0, %c0_1, %c0_2] : memref<8x1x128xf32, #tpu.memory_space<vmem>>, vector<1x1x128xf32>
    %62 = vector.shape_cast %61 : vector<1x1x128xf32> to vector<1x128xf32>
    %63 = vector.broadcast %1 : f32 to vector<1x128xf32>
    %64 = arith.mulf %63, %62 : vector<1x128xf32>
    %65 = vector.broadcast %0 : f32 to vector<1x128xf32>
    %66 = arith.addf %65, %64 : vector<1x128xf32>
    %67 = vector.broadcast %3 : f32 to vector<1x128xf32>
    %68 = arith.mulf %67, %62 : vector<1x128xf32>
    %69 = vector.broadcast %2 : f32 to vector<1x128xf32>
    %70 = arith.addf %69, %68 : vector<1x128xf32>
    %c1_3 = arith.constant 1 : index
    %c0_4 = arith.constant 0 : index
    %c0_5 = arith.constant 0 : index
    %71 = vector.load %arg1[%c1_3, %c0_4, %c0_5] : memref<8x1x128xf32, #tpu.memory_space<vmem>>, vector<1x1x128xf32>
    %72 = vector.shape_cast %71 : vector<1x1x128xf32> to vector<1x128xf32>
    %73 = vector.broadcast %5 : f32 to vector<1x128xf32>
    %74 = arith.mulf %73, %72 : vector<1x128xf32>
    %75 = vector.broadcast %4 : f32 to vector<1x128xf32>
    %76 = arith.addf %75, %74 : vector<1x128xf32>
    %77 = vector.broadcast %7 : f32 to vector<1x128xf32>
    %78 = arith.mulf %77, %72 : vector<1x128xf32>
    %79 = vector.broadcast %6 : f32 to vector<1x128xf32>
    %80 = arith.addf %79, %78 : vector<1x128xf32>
    %81 = vector.broadcast %9 : f32 to vector<1x128xf32>
    %82 = arith.mulf %81, %72 : vector<1x128xf32>
    %83 = vector.broadcast %8 : f32 to vector<1x128xf32>
    %84 = arith.addf %83, %82 : vector<1x128xf32>
    %85 = vector.broadcast %11 : f32 to vector<1x128xf32>
    %86 = arith.mulf %85, %72 : vector<1x128xf32>
    %87 = vector.broadcast %10 : f32 to vector<1x128xf32>
    %88 = arith.addf %87, %86 : vector<1x128xf32>
    %89 = arith.mulf %66, %76 : vector<1x128xf32>
    %cst = arith.constant 0.000000e+00 : f32
    %90 = vector.broadcast %cst : f32 to vector<1x128xf32>
    %91 = arith.addf %90, %89 : vector<1x128xf32>
    %92 = arith.mulf %70, %84 : vector<1x128xf32>
    %93 = arith.addf %91, %92 : vector<1x128xf32>
    %94 = arith.mulf %66, %80 : vector<1x128xf32>
    %cst_6 = arith.constant 0.000000e+00 : f32
    %95 = vector.broadcast %cst_6 : f32 to vector<1x128xf32>
    %96 = arith.addf %95, %94 : vector<1x128xf32>
    %97 = arith.mulf %70, %88 : vector<1x128xf32>
    %98 = arith.addf %96, %97 : vector<1x128xf32>
    %c2_7 = arith.constant 2 : index
    %c0_8 = arith.constant 0 : index
    %c0_9 = arith.constant 0 : index
    %99 = vector.load %arg1[%c2_7, %c0_8, %c0_9] : memref<8x1x128xf32, #tpu.memory_space<vmem>>, vector<1x1x128xf32>
    %100 = vector.shape_cast %99 : vector<1x1x128xf32> to vector<1x128xf32>
    %101 = vector.broadcast %13 : f32 to vector<1x128xf32>
    %102 = arith.mulf %101, %100 : vector<1x128xf32>
    %103 = vector.broadcast %12 : f32 to vector<1x128xf32>
    %104 = arith.addf %103, %102 : vector<1x128xf32>
    %105 = vector.broadcast %15 : f32 to vector<1x128xf32>
    %106 = arith.mulf %105, %100 : vector<1x128xf32>
    %107 = vector.broadcast %14 : f32 to vector<1x128xf32>
    %108 = arith.addf %107, %106 : vector<1x128xf32>
    %109 = vector.broadcast %17 : f32 to vector<1x128xf32>
    %110 = arith.mulf %109, %100 : vector<1x128xf32>
    %111 = vector.broadcast %16 : f32 to vector<1x128xf32>
    %112 = arith.addf %111, %110 : vector<1x128xf32>
    %113 = vector.broadcast %19 : f32 to vector<1x128xf32>
    %114 = arith.mulf %113, %100 : vector<1x128xf32>
    %115 = vector.broadcast %18 : f32 to vector<1x128xf32>
    %116 = arith.addf %115, %114 : vector<1x128xf32>
    %117 = arith.mulf %93, %104 : vector<1x128xf32>
    %cst_10 = arith.constant 0.000000e+00 : f32
    %118 = vector.broadcast %cst_10 : f32 to vector<1x128xf32>
    %119 = arith.addf %118, %117 : vector<1x128xf32>
    %120 = arith.mulf %98, %112 : vector<1x128xf32>
    %121 = arith.addf %119, %120 : vector<1x128xf32>
    %122 = arith.mulf %93, %108 : vector<1x128xf32>
    %cst_11 = arith.constant 0.000000e+00 : f32
    %123 = vector.broadcast %cst_11 : f32 to vector<1x128xf32>
    %124 = arith.addf %123, %122 : vector<1x128xf32>
    %125 = arith.mulf %98, %116 : vector<1x128xf32>
    %126 = arith.addf %124, %125 : vector<1x128xf32>
    %c3_12 = arith.constant 3 : index
    %c0_13 = arith.constant 0 : index
    %c0_14 = arith.constant 0 : index
    %127 = vector.load %arg1[%c3_12, %c0_13, %c0_14] : memref<8x1x128xf32, #tpu.memory_space<vmem>>, vector<1x1x128xf32>
    %128 = vector.shape_cast %127 : vector<1x1x128xf32> to vector<1x128xf32>
    %129 = vector.broadcast %21 : f32 to vector<1x128xf32>
    %130 = arith.mulf %129, %128 : vector<1x128xf32>
    %131 = vector.broadcast %20 : f32 to vector<1x128xf32>
    %132 = arith.addf %131, %130 : vector<1x128xf32>
    %133 = vector.broadcast %23 : f32 to vector<1x128xf32>
    %134 = arith.mulf %133, %128 : vector<1x128xf32>
    %135 = vector.broadcast %22 : f32 to vector<1x128xf32>
    %136 = arith.addf %135, %134 : vector<1x128xf32>
    %137 = vector.broadcast %25 : f32 to vector<1x128xf32>
    %138 = arith.mulf %137, %128 : vector<1x128xf32>
    %139 = vector.broadcast %24 : f32 to vector<1x128xf32>
    %140 = arith.addf %139, %138 : vector<1x128xf32>
    %141 = vector.broadcast %27 : f32 to vector<1x128xf32>
    %142 = arith.mulf %141, %128 : vector<1x128xf32>
    %143 = vector.broadcast %26 : f32 to vector<1x128xf32>
    %144 = arith.addf %143, %142 : vector<1x128xf32>
    %145 = arith.mulf %121, %132 : vector<1x128xf32>
    %cst_15 = arith.constant 0.000000e+00 : f32
    %146 = vector.broadcast %cst_15 : f32 to vector<1x128xf32>
    %147 = arith.addf %146, %145 : vector<1x128xf32>
    %148 = arith.mulf %126, %140 : vector<1x128xf32>
    %149 = arith.addf %147, %148 : vector<1x128xf32>
    %150 = arith.mulf %121, %136 : vector<1x128xf32>
    %cst_16 = arith.constant 0.000000e+00 : f32
    %151 = vector.broadcast %cst_16 : f32 to vector<1x128xf32>
    %152 = arith.addf %151, %150 : vector<1x128xf32>
    %153 = arith.mulf %126, %144 : vector<1x128xf32>
    %154 = arith.addf %152, %153 : vector<1x128xf32>
    %c7_17 = arith.constant 7 : index
    %c0_18 = arith.constant 0 : index
    %c0_19 = arith.constant 0 : index
    %155 = vector.load %arg1[%c7_17, %c0_18, %c0_19] : memref<8x1x128xf32, #tpu.memory_space<vmem>>, vector<1x1x128xf32>
    %156 = vector.shape_cast %155 : vector<1x1x128xf32> to vector<1x128xf32>
    %157 = vector.broadcast %53 : f32 to vector<1x128xf32>
    %158 = arith.mulf %157, %156 : vector<1x128xf32>
    %159 = vector.broadcast %52 : f32 to vector<1x128xf32>
    %160 = arith.addf %159, %158 : vector<1x128xf32>
    %161 = vector.broadcast %55 : f32 to vector<1x128xf32>
    %162 = arith.mulf %161, %156 : vector<1x128xf32>
    %163 = vector.broadcast %54 : f32 to vector<1x128xf32>
    %164 = arith.addf %163, %162 : vector<1x128xf32>
    %c6_20 = arith.constant 6 : index
    %c0_21 = arith.constant 0 : index
    %c0_22 = arith.constant 0 : index
    %165 = vector.load %arg1[%c6_20, %c0_21, %c0_22] : memref<8x1x128xf32, #tpu.memory_space<vmem>>, vector<1x1x128xf32>
    %166 = vector.shape_cast %165 : vector<1x1x128xf32> to vector<1x128xf32>
    %167 = vector.broadcast %45 : f32 to vector<1x128xf32>
    %168 = arith.mulf %167, %166 : vector<1x128xf32>
    %169 = vector.broadcast %44 : f32 to vector<1x128xf32>
    %170 = arith.addf %169, %168 : vector<1x128xf32>
    %171 = vector.broadcast %47 : f32 to vector<1x128xf32>
    %172 = arith.mulf %171, %166 : vector<1x128xf32>
    %173 = vector.broadcast %46 : f32 to vector<1x128xf32>
    %174 = arith.addf %173, %172 : vector<1x128xf32>
    %175 = vector.broadcast %49 : f32 to vector<1x128xf32>
    %176 = arith.mulf %175, %166 : vector<1x128xf32>
    %177 = vector.broadcast %48 : f32 to vector<1x128xf32>
    %178 = arith.addf %177, %176 : vector<1x128xf32>
    %179 = vector.broadcast %51 : f32 to vector<1x128xf32>
    %180 = arith.mulf %179, %166 : vector<1x128xf32>
    %181 = vector.broadcast %50 : f32 to vector<1x128xf32>
    %182 = arith.addf %181, %180 : vector<1x128xf32>
    %183 = arith.mulf %170, %160 : vector<1x128xf32>
    %cst_23 = arith.constant 0.000000e+00 : f32
    %184 = vector.broadcast %cst_23 : f32 to vector<1x128xf32>
    %185 = arith.addf %184, %183 : vector<1x128xf32>
    %186 = arith.mulf %174, %164 : vector<1x128xf32>
    %187 = arith.addf %185, %186 : vector<1x128xf32>
    %188 = arith.mulf %178, %160 : vector<1x128xf32>
    %cst_24 = arith.constant 0.000000e+00 : f32
    %189 = vector.broadcast %cst_24 : f32 to vector<1x128xf32>
    %190 = arith.addf %189, %188 : vector<1x128xf32>
    %191 = arith.mulf %182, %164 : vector<1x128xf32>
    %192 = arith.addf %190, %191 : vector<1x128xf32>
    %c5_25 = arith.constant 5 : index
    %c0_26 = arith.constant 0 : index
    %c0_27 = arith.constant 0 : index
    %193 = vector.load %arg1[%c5_25, %c0_26, %c0_27] : memref<8x1x128xf32, #tpu.memory_space<vmem>>, vector<1x1x128xf32>
    %194 = vector.shape_cast %193 : vector<1x1x128xf32> to vector<1x128xf32>
    %195 = vector.broadcast %37 : f32 to vector<1x128xf32>
    %196 = arith.mulf %195, %194 : vector<1x128xf32>
    %197 = vector.broadcast %36 : f32 to vector<1x128xf32>
    %198 = arith.addf %197, %196 : vector<1x128xf32>
    %199 = vector.broadcast %39 : f32 to vector<1x128xf32>
    %200 = arith.mulf %199, %194 : vector<1x128xf32>
    %201 = vector.broadcast %38 : f32 to vector<1x128xf32>
    %202 = arith.addf %201, %200 : vector<1x128xf32>
    %203 = vector.broadcast %41 : f32 to vector<1x128xf32>
    %204 = arith.mulf %203, %194 : vector<1x128xf32>
    %205 = vector.broadcast %40 : f32 to vector<1x128xf32>
    %206 = arith.addf %205, %204 : vector<1x128xf32>
    %207 = vector.broadcast %43 : f32 to vector<1x128xf32>
    %208 = arith.mulf %207, %194 : vector<1x128xf32>
    %209 = vector.broadcast %42 : f32 to vector<1x128xf32>
    %210 = arith.addf %209, %208 : vector<1x128xf32>
    %211 = arith.mulf %198, %187 : vector<1x128xf32>
    %cst_28 = arith.constant 0.000000e+00 : f32
    %212 = vector.broadcast %cst_28 : f32 to vector<1x128xf32>
    %213 = arith.addf %212, %211 : vector<1x128xf32>
    %214 = arith.mulf %202, %192 : vector<1x128xf32>
    %215 = arith.addf %213, %214 : vector<1x128xf32>
    %216 = arith.mulf %206, %187 : vector<1x128xf32>
    %cst_29 = arith.constant 0.000000e+00 : f32
    %217 = vector.broadcast %cst_29 : f32 to vector<1x128xf32>
    %218 = arith.addf %217, %216 : vector<1x128xf32>
    %219 = arith.mulf %210, %192 : vector<1x128xf32>
    %220 = arith.addf %218, %219 : vector<1x128xf32>
    %c4_30 = arith.constant 4 : index
    %c0_31 = arith.constant 0 : index
    %c0_32 = arith.constant 0 : index
    %221 = vector.load %arg1[%c4_30, %c0_31, %c0_32] : memref<8x1x128xf32, #tpu.memory_space<vmem>>, vector<1x1x128xf32>
    %222 = vector.shape_cast %221 : vector<1x1x128xf32> to vector<1x128xf32>
    %223 = vector.broadcast %29 : f32 to vector<1x128xf32>
    %224 = arith.mulf %223, %222 : vector<1x128xf32>
    %225 = vector.broadcast %28 : f32 to vector<1x128xf32>
    %226 = arith.addf %225, %224 : vector<1x128xf32>
    %227 = vector.broadcast %31 : f32 to vector<1x128xf32>
    %228 = arith.mulf %227, %222 : vector<1x128xf32>
    %229 = vector.broadcast %30 : f32 to vector<1x128xf32>
    %230 = arith.addf %229, %228 : vector<1x128xf32>
    %231 = vector.broadcast %33 : f32 to vector<1x128xf32>
    %232 = arith.mulf %231, %222 : vector<1x128xf32>
    %233 = vector.broadcast %32 : f32 to vector<1x128xf32>
    %234 = arith.addf %233, %232 : vector<1x128xf32>
    %235 = vector.broadcast %35 : f32 to vector<1x128xf32>
    %236 = arith.mulf %235, %222 : vector<1x128xf32>
    %237 = vector.broadcast %34 : f32 to vector<1x128xf32>
    %238 = arith.addf %237, %236 : vector<1x128xf32>
    %239 = arith.mulf %226, %215 : vector<1x128xf32>
    %cst_33 = arith.constant 0.000000e+00 : f32
    %240 = vector.broadcast %cst_33 : f32 to vector<1x128xf32>
    %241 = arith.addf %240, %239 : vector<1x128xf32>
    %242 = arith.mulf %230, %220 : vector<1x128xf32>
    %243 = arith.addf %241, %242 : vector<1x128xf32>
    %244 = arith.mulf %234, %215 : vector<1x128xf32>
    %cst_34 = arith.constant 0.000000e+00 : f32
    %245 = vector.broadcast %cst_34 : f32 to vector<1x128xf32>
    %246 = arith.addf %245, %244 : vector<1x128xf32>
    %247 = arith.mulf %238, %220 : vector<1x128xf32>
    %248 = arith.addf %246, %247 : vector<1x128xf32>
    %249 = vector.broadcast %56 : f32 to vector<1x128xf32>
    %250 = arith.mulf %249, %243 : vector<1x128xf32>
    %cst_35 = arith.constant 0.000000e+00 : f32
    %251 = vector.broadcast %cst_35 : f32 to vector<1x128xf32>
    %252 = arith.addf %251, %250 : vector<1x128xf32>
    %253 = vector.broadcast %57 : f32 to vector<1x128xf32>
    %254 = arith.mulf %253, %248 : vector<1x128xf32>
    %255 = arith.addf %252, %254 : vector<1x128xf32>
    %256 = arith.mulf %149, %255 : vector<1x128xf32>
    %cst_36 = arith.constant 0.000000e+00 : f32
    %257 = vector.broadcast %cst_36 : f32 to vector<1x128xf32>
    %258 = arith.addf %257, %256 : vector<1x128xf32>
    %259 = vector.broadcast %58 : f32 to vector<1x128xf32>
    %260 = arith.mulf %259, %243 : vector<1x128xf32>
    %cst_37 = arith.constant 0.000000e+00 : f32
    %261 = vector.broadcast %cst_37 : f32 to vector<1x128xf32>
    %262 = arith.addf %261, %260 : vector<1x128xf32>
    %263 = vector.broadcast %59 : f32 to vector<1x128xf32>
    %264 = arith.mulf %263, %248 : vector<1x128xf32>
    %265 = arith.addf %262, %264 : vector<1x128xf32>
    %266 = arith.mulf %154, %265 : vector<1x128xf32>
    %267 = arith.addf %258, %266 : vector<1x128xf32>
    %268 = vector.broadcast %60 : f32 to vector<1x128xf32>
    %269 = arith.addf %268, %267 : vector<1x128xf32>
    %c0_38 = arith.constant 0 : index
    %c0_39 = arith.constant 0 : index
    %270 = vector.load %arg3[%c0_38, %c0_39] : memref<1x128xf32, #tpu.memory_space<vmem>>, vector<1x128xf32>
    tpu.vector_store %arg3[%c0_38, %c0_39], %269 {strides = array<i32>} : memref<1x128xf32, #tpu.memory_space<vmem>>, vector<1x128xf32>,
    return
  }
  func.func @transform_0(%arg0: i32) -> (i32, i32, i32) {
    %c0_i32 = arith.constant 0 : i32
    %c0_i32_0 = arith.constant 0 : i32
    %c0_i32_1 = arith.constant 0 : i32
    return %c0_i32, %arg0, %c0_i32_0 : i32, i32, i32
  }
  func.func @transform_1(%arg0: i32) -> i32 {
    %c0_i32 = arith.constant 0 : i32
    %c0_i32_0 = arith.constant 0 : i32
    return %c0_i32 : i32
  }
  func.func @transform_2(%arg0: i32) -> (i32, i32) {
    %c0_i32 = arith.constant 0 : i32
    %c0_i32_0 = arith.constant 0 : i32
    return %arg0, %c0_i32 : i32, i32
  }
}

</mosaic_0001>

<llo_original>
// kernel: mps_with_dense.1
$region0: #{mps_with_dense.1}
  #allocation0 [shape = 'u32[]', space=smem, size = 0x4, offset = 0x4, fixed_abs, tag = 'smem constant byte address 0x4 - core index']
  #allocation1 [shape = 'u32[72,128]{1,0:T(1,128)}', space=vmem, size = 0x9000, scoped, tag = 'internal scratch']
  %s0 = inlined_call_operand.vmem [shape: f32[8,1,128], index: 0, kind: input, shape index: {}]
  %s1 = inlined_call_operand.vmem [shape: f32[61], index: 1, kind: input, shape index: {}]
  %s2 = inlined_call_operand.vmem [shape: f32[1,128], index: 2, kind: output, shape index: {}]
  %s3 = sld [smem:[#allocation0]]
  $region22: #{mps_with_dense.1} parent=0
    _
  %s5 = ssub.s32 1, %s3
  %s6 = scalar_select 0, %s5, %s3
  $region1: #{mps_with_dense.1} parent=0
    #allocation2 [shape = 'u8[512]{0}', space=smem, size = 0x200, scoped, tag = 'input window, operand 1, single buffered']
    #allocation3 [shape = 's32[1]{0}', space=sflag, size = 0x4, scoped, tag = 'scoped memory for mps_with_dense.1']
    %7 = vsyncpa [#allocation3], 0
    // Predicated region
    $region2: #{mps_with_dense.1} parent=1 // pred_check
      _
    $region3: #{mps_with_dense.1} parent=1 // pred_check_branch
      %9 = sbr.rel (0) target = $region5
    $region4: #{mps_with_dense.1} parent=1 // pred_region
      _
    $region5: #{mps_with_dense.1} parent=1 // pred_fallthru
      _
    // Predicated region
    $region6: #{mps_with_dense.1} parent=1 // pred_check
      _
    $region7: #{mps_with_dense.1} parent=1 // pred_check_branch
      %11 = sbr.rel (0) target = $region9
    $region8: #{mps_with_dense.1} parent=1 // pred_region
      %13 = vsyncadd [#allocation3], 0
      %s15 = sshll.u32 %s1, 4
      %s16 = int_to_ptr.vmem [resolvable:$true] %s15
      %18 = dma.vmem_to_smem %s16, 16, [#allocation2], [#allocation3]
    $region9: #{mps_with_dense.1} parent=1 // pred_fallthru
      _
    // Predicated region
    $region10: #{mps_with_dense.1} parent=1 // pred_check
      _
    $region11: #{mps_with_dense.1} parent=1 // pred_check_branch
      %20 = sbr.rel (0) target = $region13
    $region12: #{mps_with_dense.1} parent=1 // pred_region
      %22 = dma.done [#allocation3], 16
    $region13: #{mps_with_dense.1} parent=1 // pred_fallthru
      _
    %23 = sfence
    %s24 = sld [smem:[#allocation2]]
    %s25 = sld [smem:[#allocation2 + $0x2]]
    %s26 = sld [smem:[#allocation2 + $0x1]]
    %s27 = sld [smem:[#allocation2 + $0x3]]
    %s28 = sld [smem:[#allocation2 + $0x4]]
    %s29 = sld [smem:[#allocation2 + $0x6]]
    %s30 = sld [smem:[#allocation2 + $0x5]]
    %s31 = sld [smem:[#allocation2 + $0x7]]
    %s32 = sld [smem:[#allocation2 + $0x8]]
    %s33 = sld [smem:[#allocation2 + $0xa]]
    %s34 = sld [smem:[#allocation2 + $0x9]]
    %s35 = sld [smem:[#allocation2 + $0xb]]
    %s36 = sld [smem:[#allocation2 + $0xc]]
    %s37 = sld [smem:[#allocation2 + $0xe]]
    %s38 = sld [smem:[#allocation2 + $0xd]]
    %s39 = sld [smem:[#allocation2 + $0xf]]
    %s40 = sld [smem:[#allocation2 + $0x10]]
    %s41 = sld [smem:[#allocation2 + $0x12]]
    %s42 = sld [smem:[#allocation2 + $0x11]]
    %s43 = sld [smem:[#allocation2 + $0x13]]
    %s44 = sld [smem:[#allocation2 + $0x14]]
    %s45 = sld [smem:[#allocation2 + $0x16]]
    %s46 = sld [smem:[#allocation2 + $0x15]]
    %s47 = sld [smem:[#allocation2 + $0x17]]
    %s48 = sld [smem:[#allocation2 + $0x18]]
    %s49 = sld [smem:[#allocation2 + $0x1a]]
    %s50 = sld [smem:[#allocation2 + $0x19]]
    %s51 = sld [smem:[#allocation2 + $0x1b]]
    %s52 = sld [smem:[#allocation2 + $0x1c]]
    %s53 = sld [smem:[#allocation2 + $0x1e]]
    %s54 = sld [smem:[#allocation2 + $0x1d]]
    %s55 = sld [smem:[#allocation2 + $0x1f]]
    %s56 = sld [smem:[#allocation2 + $0x20]]
    %s57 = sld [smem:[#allocation2 + $0x22]]
    %s58 = sld [smem:[#allocation2 + $0x21]]
    %s59 = sld [smem:[#allocation2 + $0x23]]
    %s60 = sld [smem:[#allocation2 + $0x24]]
    %s61 = sld [smem:[#allocation2 + $0x26]]
    %s62 = sld [smem:[#allocation2 + $0x25]]
    %s63 = sld [smem:[#allocation2 + $0x27]]
    %s64 = sld [smem:[#allocation2 + $0x28]]
    %s65 = sld [smem:[#allocation2 + $0x2a]]
    %s66 = sld [smem:[#allocation2 + $0x29]]
    %s67 = sld [smem:[#allocation2 + $0x2b]]
    %s68 = sld [smem:[#allocation2 + $0x2c]]
    %s69 = sld [smem:[#allocation2 + $0x2e]]
    %s70 = sld [smem:[#allocation2 + $0x2d]]
    %s71 = sld [smem:[#allocation2 + $0x2f]]
    %s72 = sld [smem:[#allocation2 + $0x30]]
    %s73 = sld [smem:[#allocation2 + $0x32]]
    %s74 = sld [smem:[#allocation2 + $0x31]]
    %s75 = sld [smem:[#allocation2 + $0x33]]
    %s76 = sld [smem:[#allocation2 + $0x34]]
    %s77 = sld [smem:[#allocation2 + $0x35]]
    %s78 = sld [smem:[#allocation2 + $0x36]]
    %s79 = sld [smem:[#allocation2 + $0x37]]
    %s80 = sld [smem:[#allocation2 + $0x38]]
    %s81 = sld [smem:[#allocation2 + $0x39]]
    %s82 = sld [smem:[#allocation2 + $0x3a]]
    %s83 = sld [smem:[#allocation2 + $0x3b]]
    %s84 = sld [smem:[#allocation2 + $0x3c]]
    %v85 = vld [vmem:[%s0] sm:$0x1]
    %v86 = vstv %s25
    %v87 = vmul.f32 %v86, %v85
    %v88 = vstv %s24
    %v89 = vadd.f32 %v88, %v87
    %v90 = vstv %s27
    %v91 = vmul.f32 %v90, %v85
    %v92 = vstv %s26
    %v93 = vadd.f32 %v92, %v91
    %s94 = scalar_lea.vmem %s0, 1
    %v95 = vld [vmem:[%s94] sm:$0x1]
    %v96 = vstv %s29
    %v97 = vmul.f32 %v96, %v95
    %v98 = vstv %s28
    %v99 = vadd.f32 %v98, %v97
    %v100 = vstv %s31
    %v101 = vmul.f32 %v100, %v95
    %v102 = vstv %s30
    %v103 = vadd.f32 %v102, %v101
    %v104 = vstv %s33
    %v105 = vmul.f32 %v104, %v95
    %v106 = vstv %s32
    %v107 = vadd.f32 %v106, %v105
    %v108 = vstv %s35
    %v109 = vmul.f32 %v108, %v95
    %v110 = vstv %s34
    %v111 = vadd.f32 %v110, %v109
    %v112 = vmul.f32 %v89, %v99
    %v113 = vadd.f32 %v112, 0.0
    %v114 = vmul.f32 %v93, %v107
    %v115 = vadd.f32 %v113, %v114
    %v116 = vmul.f32 %v89, %v103
    %v117 = vadd.f32 %v116, 0.0
    %v118 = vmul.f32 %v93, %v111
    %v119 = vadd.f32 %v117, %v118
    %s120 = scalar_lea.vmem %s0, 2
    %v121 = vld [vmem:[%s120] sm:$0x1]
    %v122 = vstv %s37
    %v123 = vmul.f32 %v122, %v121
    %v124 = vstv %s36
    %v125 = vadd.f32 %v124, %v123
    %v126 = vstv %s39
    %v127 = vmul.f32 %v126, %v121
    %v128 = vstv %s38
    %v129 = vadd.f32 %v128, %v127
    %v130 = vstv %s41
    %v131 = vmul.f32 %v130, %v121
    %v132 = vstv %s40
    %v133 = vadd.f32 %v132, %v131
    %v134 = vstv %s43
    %v135 = vmul.f32 %v134, %v121
    %v136 = vstv %s42
    %v137 = vadd.f32 %v136, %v135
    %v138 = vmul.f32 %v115, %v125
    %v139 = vadd.f32 %v138, 0.0
    %v140 = vmul.f32 %v119, %v133
    %v141 = vadd.f32 %v139, %v140
    %v142 = vmul.f32 %v115, %v129
    %v143 = vadd.f32 %v142, 0.0
    %v144 = vmul.f32 %v119, %v137
    %v145 = vadd.f32 %v143, %v144
    %s146 = scalar_lea.vmem %s0, 3
    %v147 = vld [vmem:[%s146] sm:$0x1]
    %v148 = vstv %s45
    %v149 = vmul.f32 %v148, %v147
    %v150 = vstv %s44
    %v151 = vadd.f32 %v150, %v149
    %v152 = vstv %s47
    %v153 = vmul.f32 %v152, %v147
    %v154 = vstv %s46
    %v155 = vadd.f32 %v154, %v153
    %v156 = vstv %s49
    %v157 = vmul.f32 %v156, %v147
    %v158 = vstv %s48
    %v159 = vadd.f32 %v158, %v157
    %v160 = vstv %s51
    %v161 = vmul.f32 %v160, %v147
    %v162 = vstv %s50
    %v163 = vadd.f32 %v162, %v161
    %v164 = vmul.f32 %v141, %v151
    %v165 = vadd.f32 %v164, 0.0
    %v166 = vmul.f32 %v145, %v159
    %v167 = vadd.f32 %v165, %v166
    %v168 = vmul.f32 %v141, %v155
    %v169 = vadd.f32 %v168, 0.0
    %v170 = vmul.f32 %v145, %v163
    %v171 = vadd.f32 %v169, %v170
    %s172 = scalar_lea.vmem %s0, 7
    %v173 = vld [vmem:[%s172] sm:$0x1]
    %v174 = vstv %s77
    %v175 = vmul.f32 %v174, %v173
    %v176 = vstv %s76
    %v177 = vadd.f32 %v176, %v175
    %v178 = vstv %s79
    %v179 = vmul.f32 %v178, %v173
    %v180 = vstv %s78
    %v181 = vadd.f32 %v180, %v179
    %s182 = scalar_lea.vmem %s0, 6
    %v183 = vld [vmem:[%s182] sm:$0x1]
    %v184 = vstv %s69
    %v185 = vmul.f32 %v184, %v183
    %v186 = vstv %s68
    %v187 = vadd.f32 %v186, %v185
    %v188 = vstv %s71
    %v189 = vmul.f32 %v188, %v183
    %v190 = vstv %s70
    %v191 = vadd.f32 %v190, %v189
    %v192 = vstv %s73
    %v193 = vmul.f32 %v192, %v183
    %v194 = vstv %s72
    %v195 = vadd.f32 %v194, %v193
    %v196 = vstv %s75
    %v197 = vmul.f32 %v196, %v183
    %v198 = vstv %s74
    %v199 = vadd.f32 %v198, %v197
    %v200 = vmul.f32 %v187, %v177
    %v201 = vadd.f32 %v200, 0.0
    %v202 = vmul.f32 %v191, %v181
    %v203 = vadd.f32 %v201, %v202
    %v204 = vmul.f32 %v195, %v177
    %v205 = vadd.f32 %v204, 0.0
    %v206 = vmul.f32 %v199, %v181
    %v207 = vadd.f32 %v205, %v206
    %s208 = scalar_lea.vmem %s0, 5
    %v209 = vld [vmem:[%s208] sm:$0x1]
    %v210 = vstv %s61
    %v211 = vmul.f32 %v210, %v209
    %v212 = vstv %s60
    %v213 = vadd.f32 %v212, %v211
    %v214 = vstv %s63
    %v215 = vmul.f32 %v214, %v209
    %v216 = vstv %s62
    %v217 = vadd.f32 %v216, %v215
    %v218 = vstv %s65
    %v219 = vmul.f32 %v218, %v209
    %v220 = vstv %s64
    %v221 = vadd.f32 %v220, %v219
    %v222 = vstv %s67
    %v223 = vmul.f32 %v222, %v209
    %v224 = vstv %s66
    %v225 = vadd.f32 %v224, %v223
    %v226 = vmul.f32 %v213, %v203
    %v227 = vadd.f32 %v226, 0.0
    %v228 = vmul.f32 %v217, %v207
    %v229 = vadd.f32 %v227, %v228
    %v230 = vmul.f32 %v221, %v203
    %v231 = vadd.f32 %v230, 0.0
    %v232 = vmul.f32 %v225, %v207
    %v233 = vadd.f32 %v231, %v232
    %s234 = scalar_lea.vmem %s0, 4
    %v235 = vld [vmem:[%s234] sm:$0x1]
    %v236 = vstv %s53
    %v237 = vmul.f32 %v236, %v235
    %v238 = vstv %s52
    %v239 = vadd.f32 %v238, %v237
    %v240 = vstv %s55
    %v241 = vmul.f32 %v240, %v235
    %v242 = vstv %s54
    %v243 = vadd.f32 %v242, %v241
    %v244 = vstv %s57
    %v245 = vmul.f32 %v244, %v235
    %v246 = vstv %s56
    %v247 = vadd.f32 %v246, %v245
    %v248 = vstv %s59
    %v249 = vmul.f32 %v248, %v235
    %v250 = vstv %s58
    %v251 = vadd.f32 %v250, %v249
    %v252 = vmul.f32 %v239, %v229
    %v253 = vadd.f32 %v252, 0.0
    %v254 = vmul.f32 %v243, %v233
    %v255 = vadd.f32 %v253, %v254
    %v256 = vmul.f32 %v247, %v229
    %v257 = vadd.f32 %v256, 0.0
    %v258 = vmul.f32 %v251, %v233
    %v259 = vadd.f32 %v257, %v258
    %v260 = vstv %s80
    %v261 = vmul.f32 %v260, %v255
    %v262 = vadd.f32 %v261, 0.0
    %v263 = vstv %s81
    %v264 = vmul.f32 %v263, %v259
    %v265 = vadd.f32 %v262, %v264
    %v266 = vmul.f32 %v167, %v265
    %v267 = vadd.f32 %v266, 0.0
    %v268 = vstv %s82
    %v269 = vmul.f32 %v268, %v255
    %v270 = vadd.f32 %v269, 0.0
    %v271 = vstv %s83
    %v272 = vmul.f32 %v271, %v259
    %v273 = vadd.f32 %v270, %v272
    %v274 = vmul.f32 %v171, %v273
    %v275 = vadd.f32 %v267, %v274
    %v276 = vstv %s84
    %v277 = vadd.f32 %v276, %v275
    %278 = vst [vmem:[%s2] sm:$0x1] %v277
    // Predicated region
    $region14: #{mps_with_dense.1} parent=1 // pred_check
      _
    $region15: #{mps_with_dense.1} parent=1 // pred_check_branch
      %280 = sbr.rel (0) target = $region17
    $region16: #{mps_with_dense.1} parent=1 // pred_region
      _
    $region17: #{mps_with_dense.1} parent=1 // pred_fallthru
      _
    // Predicated region
    $region18: #{mps_with_dense.1} parent=1 // pred_check
      _
    $region19: #{mps_with_dense.1} parent=1 // pred_check_branch
      %282 = sbr.rel (0) target = $region21
    $region20: #{mps_with_dense.1} parent=1 // pred_region
      _
    $region21: #{mps_with_dense.1} parent=1 // pred_fallthru
      _
    %283 = vsyncpa [#allocation3], 1

</llo_original>
